<compile_context>
chip_gen: v7x
topology: tpu7x:2x2x1
jax: 0.10.0
libtpu: 0.0.40
codegen_flags: <defaults>
</compile_context>

<pallas_src>
import jax
import jax.numpy as jnp
from jax.experimental import pallas as pl
from jax.experimental.pallas import tpu as pltpu

# ----- synthetic inner-model dimensions (small, TPU-friendly) -----
B = 8        # demo batch
D_IN = 32    # input features
H1 = 128     # hidden layer 1 (hooked)
H2 = 256     # hidden layer 2 (hooked)
# The final, non-hooked Linear layer of the inner model is NOT computed: its
# output is discarded by ActivationExtractor.forward.


def _mlp_extract_kernel(x_ref, w1_ref, b1_ref, w2_ref, b2_ref, out_ref):
    """Fused hooked-layer forward; writes both hooked activations into one
    lane-dense output slab: out[:, :H1] = relu(x@W1+b1), out[:, H1:] = relu(h1@W2+b2)."""
    x = x_ref[...]                                             # (TB, D_IN) bf16

    # layer 1: Linear + ReLU  (hooked)  — bf16 MXU, f32 accumulate/epilogue
    h1 = jnp.dot(x, w1_ref[...], preferred_element_type=jnp.float32) + b1_ref[...]
    h1 = jnp.maximum(h1, 0.0)

    # layer 2: Linear + ReLU  (hooked)
    h2 = jnp.dot(h1.astype(jnp.bfloat16), w2_ref[...],
                 preferred_element_type=jnp.float32) + b2_ref[...]
    h2 = jnp.maximum(h2, 0.0)

    # fused hstack: both hooked activations land in a single (TB, H1+H2) tile;
    # H1 = 128 so both stores stay on lane boundaries (unmasked vst).
    out_ref[:, :H1] = h1.astype(out_ref.dtype)
    out_ref[:, H1:] = h2.astype(out_ref.dtype)


def _round_up(n, m):
    return ((n + m - 1) // m) * m


def _choose_batch_tile(batch):
    """Pick the batch tile TB.

    * batch <= 256: single grid step, full-array block (demo-size path).
    * batch  > 256: tiles are a multiple of 256, capped at 2048 (mem-bound:
      big tiles approach the HBM roofline), and chosen so the grid has >= 2
      steps so both v7x TensorCores get work (neutral on 1-TC v5e/v6e).
    """
    if batch <= 256:
        return batch
    tb = _round_up(pl.cdiv(batch, 2), 256)
    return min(tb, 2048)


def activation_extractor_forward(x, params, *, out_dtype=jnp.bfloat16):
    """Equivalent of ActivationExtractor.forward: run the (hooked part of the)
    inner model and return hstack of the hooked hidden activations."""
    w1, b1, w2, b2 = params
    batch = x.shape[0]

    # bf16 MXU-native matmul operands; biases stay f32 (added after the f32
    # accumulation inside the kernel).
    x = x.astype(jnp.bfloat16)
    w1 = w1.astype(jnp.bfloat16)
    w2 = w2.astype(jnp.bfloat16)
    b1 = b1.astype(jnp.float32)
    b2 = b2.astype(jnp.float32)

    tb = _choose_batch_tile(batch)
    grid = (pl.cdiv(batch, tb),)

    out = pl.pallas_call(
        _mlp_extract_kernel,
        grid=grid,
        in_specs=[
            pl.BlockSpec((tb, D_IN), lambda i: (i, 0)),   # x tile   (streams)
            pl.BlockSpec((D_IN, H1), lambda i: (0, 0)),   # W1       (resident)
            pl.BlockSpec((1, H1),    lambda i: (0, 0)),   # b1       (resident)
            pl.BlockSpec((H1, H2),   lambda i: (0, 0)),   # W2       (resident)
            pl.BlockSpec((1, H2),    lambda i: (0, 0)),   # b2       (resident)
        ],
        out_specs=pl.BlockSpec((tb, H1 + H2), lambda i: (i, 0)),
        out_shape=jax.ShapeDtypeStruct((batch, H1 + H2), out_dtype),
        compiler_params=pltpu.CompilerParams(
            dimension_semantics=("parallel",),
            vmem_limit_bytes=32 * 1024 * 1024,
        ),
    )(x, w1, b1, w2, b2)

    return out


def _init_params(key):
    """Deterministic synthetic parameters (shapes implied by the inner MLP)."""
    k1, k2, k3, k4 = jax.random.split(key, 4)
    w1 = jax.random.normal(k1, (D_IN, H1), jnp.float32) * 0.05
    b1 = jax.random.normal(k2, (1, H1), jnp.float32) * 0.01
    w2 = jax.random.normal(k3, (H1, H2), jnp.float32) * 0.05
    b2 = jax.random.normal(k4, (1, H2), jnp.float32) * 0.01
    return (w1, b1, w2, b2)


def _reference(x, params, out_dtype=jnp.bfloat16):
    """Pure-JAX reference with the same numerics (bf16 operands, f32 math)."""
    w1, b1, w2, b2 = params
    xb = x.astype(jnp.bfloat16).astype(jnp.float32)
    w1b = w1.astype(jnp.bfloat16).astype(jnp.float32)
    w2b = w2.astype(jnp.bfloat16).astype(jnp.float32)
    h1 = jnp.maximum(xb @ w1b + b1, 0.0)
    h2 = jnp.maximum(h1.astype(jnp.bfloat16).astype(jnp.float32) @ w2b + b2, 0.0)
    return jnp.concatenate([h1, h2], axis=1).astype(out_dtype)


def _check(batch, key, params):
    x = jax.random.normal(key, (batch, D_IN), jnp.float32)
    out = jax.block_until_ready(activation_extractor_forward(x, params))
    ref = _reference(x, params)
    assert out.shape == (batch, H1 + H2), out.shape
    assert out.dtype == jnp.bfloat16, out.dtype
    assert jnp.allclose(out.astype(jnp.float32), ref.astype(jnp.float32),
                        atol=2e-2, rtol=2e-2), f"mismatch vs reference (batch={batch})"


if __name__ == "__main__":
    root = jax.random.PRNGKey(0)
    kx1, kx2, kp = jax.random.split(root, 3)
    params = _init_params(kp)

    # Demo size from the module spec: single grid step.
    _check(B, kx1, params)
    # Tiled path: batch > 256, non-multiple of the tile -> 2 grid steps with a
    # ragged tail (exercises padded-tail discard + "parallel" batch sharding).
    _check(300, kx2, params)

    # TODO(synk): the hook-registration / submodule-membership logging in the
    # PyTorch __init__ is Python bookkeeping with no kernel-level equivalent.
    print("KERNEL_OK")
</pallas_src>

<mosaic_0001>
module attributes {stable_mosaic.version = 11 : i64} {
  func.func @_mlp_extract_kernel(%arg0: i32, %arg1: memref<8x32xbf16, #tpu.memory_space<vmem>>, %arg2: memref<32x128xbf16, #tpu.memory_space<vmem>>, %arg3: memref<1x128xf32, #tpu.memory_space<vmem>>, %arg4: memref<128x256xbf16, #tpu.memory_space<vmem>>, %arg5: memref<1x256xf32, #tpu.memory_space<vmem>>, %arg6: memref<8x384xbf16, #tpu.memory_space<vmem>>) attributes {dimension_semantics = [#tpu.dimension_semantics<parallel>], iteration_bounds = array<i64: 1>, scalar_prefetch = 0 : i64, scratch_operands = 0 : i64, tpu.core_type = #tpu.core_type<tc>, window_params = [{transform_indices = @transform_0, window_bounds = array<i64: 8, 32>}, {pipeline_mode = #tpu.pipeline_mode<synchronous>, transform_indices = @transform_1, window_bounds = array<i64: 32, 128>}, {pipeline_mode = #tpu.pipeline_mode<synchronous>, transform_indices = @transform_2, window_bounds = array<i64: 1, 128>}, {pipeline_mode = #tpu.pipeline_mode<synchronous>, transform_indices = @transform_3, window_bounds = array<i64: 128, 256>}, {pipeline_mode = #tpu.pipeline_mode<synchronous>, transform_indices = @transform_4, window_bounds = array<i64: 1, 256>}, {transform_indices = @transform_5, window_bounds = array<i64: 8, 384>}]} {
    %c0 = arith.constant 0 : index
    %c0_0 = arith.constant 0 : index
    %0 = vector.load %arg1[%c0, %c0_0] : memref<8x32xbf16, #tpu.memory_space<vmem>>, vector<8x32xbf16>
    %c0_1 = arith.constant 0 : index
    %c0_2 = arith.constant 0 : index
    %1 = vector.load %arg2[%c0_1, %c0_2] : memref<32x128xbf16, #tpu.memory_space<vmem>>, vector<32x128xbf16>
    %cst = arith.constant dense<0.000000e+00> : vector<8x128xf32>
    %2 = tpu.matmul %0, %1, %cst {dimension_numbers = #tpu.dot_dimension_numbers<[1], [0], [0], [1], [0, 0, 1, 1], [], []>} : vector<8x32xbf16>, vector<32x128xbf16>, vector<8x128xf32> -> vector<8x128xf32>
    %c0_3 = arith.constant 0 : index
    %c0_4 = arith.constant 0 : index
    %3 = vector.load %arg3[%c0_3, %c0_4] : memref<1x128xf32, #tpu.memory_space<vmem>>, vector<1x128xf32>
    %4 = vector.broadcast %3 : vector<1x128xf32> to vector<8x128xf32>
    %5 = arith.addf %2, %4 : vector<8x128xf32>
    %cst_5 = arith.constant 0.000000e+00 : f32
    %6 = vector.broadcast %cst_5 : f32 to vector<8x128xf32>
    %7 = arith.maximumf %5, %6 : vector<8x128xf32>
    %8 = arith.truncf %7 : vector<8x128xf32> to vector<8x128xbf16>
    %c0_6 = arith.constant 0 : index
    %c0_7 = arith.constant 0 : index
    %9 = vector.load %arg4[%c0_6, %c0_7] : memref<128x256xbf16, #tpu.memory_space<vmem>>, vector<128x256xbf16>
    %cst_8 = arith.constant dense<0.000000e+00> : vector<8x256xf32>
    %10 = tpu.matmul %8, %9, %cst_8 {dimension_numbers = #tpu.dot_dimension_numbers<[1], [0], [0], [1], [0, 0, 1, 1], [], []>} : vector<8x128xbf16>, vector<128x256xbf16>, vector<8x256xf32> -> vector<8x256xf32>
    %c0_9 = arith.constant 0 : index
    %c0_10 = arith.constant 0 : index
    %11 = vector.load %arg5[%c0_9, %c0_10] : memref<1x256xf32, #tpu.memory_space<vmem>>, vector<1x256xf32>
    %12 = vector.broadcast %11 : vector<1x256xf32> to vector<8x256xf32>
    %13 = arith.addf %10, %12 : vector<8x256xf32>
    %cst_11 = arith.constant 0.000000e+00 : f32
    %14 = vector.broadcast %cst_11 : f32 to vector<8x256xf32>
    %15 = arith.maximumf %13, %14 : vector<8x256xf32>
    %16 = arith.truncf %7 : vector<8x128xf32> to vector<8x128xbf16>
    %c0_12 = arith.constant 0 : index
    %c0_13 = arith.constant 0 : index
    %17 = vector.load %arg6[%c0_12, %c0_13] : memref<8x384xbf16, #tpu.memory_space<vmem>>, vector<8x128xbf16>
    tpu.vector_store %arg6[%c0_12, %c0_13], %16 {strides = array<i32>} : memref<8x384xbf16, #tpu.memory_space<vmem>>, vector<8x128xbf16>,
    %18 = arith.truncf %15 : vector<8x256xf32> to vector<8x256xbf16>
    %c0_14 = arith.constant 0 : index
    %c128 = arith.constant 128 : index
    %19 = vector.load %arg6[%c0_14, %c128] : memref<8x384xbf16, #tpu.memory_space<vmem>>, vector<8x256xbf16>
    tpu.vector_store %arg6[%c0_14, %c128], %18 {strides = array<i32>} : memref<8x384xbf16, #tpu.memory_space<vmem>>, vector<8x256xbf16>,
    return
  }
  func.func @transform_0(%arg0: i32) -> (i32, i32) {
    %c0_i32 = arith.constant 0 : i32
    %c0_i32_0 = arith.constant 0 : i32
    return %arg0, %c0_i32 : i32, i32
  }
  func.func @transform_1(%arg0: i32) -> (i32, i32) {
    %c0_i32 = arith.constant 0 : i32
    %c0_i32_0 = arith.constant 0 : i32
    %c0_i32_1 = arith.constant 0 : i32
    return %c0_i32, %c0_i32_0 : i32, i32
  }
  func.func @transform_2(%arg0: i32) -> (i32, i32) {
    %c0_i32 = arith.constant 0 : i32
    %c0_i32_0 = arith.constant 0 : i32
    %c0_i32_1 = arith.constant 0 : i32
    return %c0_i32, %c0_i32_0 : i32, i32
  }
  func.func @transform_3(%arg0: i32) -> (i32, i32) {
    %c0_i32 = arith.constant 0 : i32
    %c0_i32_0 = arith.constant 0 : i32
    %c0_i32_1 = arith.constant 0 : i32
    return %c0_i32, %c0_i32_0 : i32, i32
  }
  func.func @transform_4(%arg0: i32) -> (i32, i32) {
    %c0_i32 = arith.constant 0 : i32
    %c0_i32_0 = arith.constant 0 : i32
    %c0_i32_1 = arith.constant 0 : i32
    return %c0_i32, %c0_i32_0 : i32, i32
  }
  func.func @transform_5(%arg0: i32) -> (i32, i32) {
    %c0_i32 = arith.constant 0 : i32
    %c0_i32_0 = arith.constant 0 : i32
    return %arg0, %c0_i32 : i32, i32
  }
}

</mosaic_0001>

<llo_original>
// kernel: tpu_custom_call.1
$region0: #{tpu_custom_call.1}
  #allocation0 [shape = 'u32[]', space=smem, size = 0x4, offset = 0x4, fixed_abs, tag = 'smem constant byte address 0x4 - core index']
  #allocation1 [shape = 'u32[144,128]{1,0:T(1,128)}', space=vmem, size = 0x12000, scoped, tag = 'internal scratch']
  %s0 = inlined_call_operand.hbm [shape: bf16[8,32], index: 0, kind: input, shape index: {}]
  %s1 = inlined_call_operand.hbm [shape: bf16[32,128], index: 1, kind: input, shape index: {}]
  %s2 = inlined_call_operand.vmem [shape: f32[1,128], index: 2, kind: input, shape index: {}]
  %s3 = inlined_call_operand.hbm [shape: bf16[128,256], index: 3, kind: input, shape index: {}]
  %s4 = inlined_call_operand.vmem [shape: f32[1,256], index: 4, kind: input, shape index: {}]
  %s5 = inlined_call_operand.hbm [shape: bf16[8,384], index: 5, kind: output, shape index: {}]
  %s6 = sld [smem:[#allocation0]]
  $region42: #{tpu_custom_call.1} parent=0
    _
  %s8 = ssub.s32 1, %s6
  %s9 = scalar_select 0, %s8, %s6
  $region1: #{tpu_custom_call.1} parent=0
    #allocation2 [shape = 'u8[2048]{0}', space=vmem, size = 0x800, scoped, tag = 'input window, operand 0, single buffered']
    #allocation3 [shape = 's32[1]{0}', space=sflag, size = 0x4, scoped, tag = 'scoped memory for tpu_custom_call.1']
    #allocation4 [shape = 's32[1]{0}', space=sflag, size = 0x4, scoped, tag = 'scoped memory for tpu_custom_call.1']
    #allocation5 [shape = 'u8[8192]{0}', space=vmem, size = 0x2000, scoped, tag = 'input window, operand 1, single buffered']
    #allocation6 [shape = 's32[1]{0}', space=sflag, size = 0x4, scoped, tag = 'scoped memory for tpu_custom_call.1']
    #allocation7 [shape = 'u8[65536]{0}', space=vmem, size = 0x10000, scoped, tag = 'input window, operand 3, single buffered']
    #allocation8 [shape = 'u8[6144]{0}', space=vmem, size = 0x1800, scoped, tag = 'output window, operand 0, single buffered']
    %10 = vsyncpa [#allocation3], 0
    %11 = vsyncpa [#allocation6], 0
    %12 = vsyncpa [#allocation4], 0
    // Predicated region
    $region2: #{tpu_custom_call.1} parent=1 // pred_check
      _
    $region3: #{tpu_custom_call.1} parent=1 // pred_check_branch
      %14 = sbr.rel (0) target = $region5
    $region4: #{tpu_custom_call.1} parent=1 // pred_region
      %s16 = ssub.s32 64, 64
      %17 = vsyncadd [#allocation3], %s16
      %s19 = sshll.u32 [#allocation2], 4
      %s20 = int_to_ptr.vmem [resolvable:$true] %s19
      %22 = dma.hbm_to_vmem [thread:$0]  %s0, 64, %s20, [#allocation3]
    $region5: #{tpu_custom_call.1} parent=1 // pred_fallthru
      _
    // Predicated region
    $region6: #{tpu_custom_call.1} parent=1 // pred_check
      _
    $region7: #{tpu_custom_call.1} parent=1 // pred_check_branch
      %24 = sbr.rel (0) target = $region9
    $region8: #{tpu_custom_call.1} parent=1 // pred_region
      %s26 = ssub.s32 256, 256
      %27 = vsyncadd [#allocation6], %s26
      %s28 = sshll.u32 [#allocation5], 4
      %s29 = int_to_ptr.vmem [resolvable:$true] %s28
      %34 = dma.hbm_to_vmem [thread:$0]  %s1, 256, %s29, [#allocation6], 64, 64, 4
    $region9: #{tpu_custom_call.1} parent=1 // pred_fallthru
      _
    // Predicated region
    $region10: #{tpu_custom_call.1} parent=1 // pred_check
      _
    $region11: #{tpu_custom_call.1} parent=1 // pred_check_branch
      %36 = sbr.rel (0) target = $region13
    $region12: #{tpu_custom_call.1} parent=1 // pred_region
      _
    $region13: #{tpu_custom_call.1} parent=1 // pred_fallthru
      _
    // Predicated region
    $region14: #{tpu_custom_call.1} parent=1 // pred_check
      _
    $region15: #{tpu_custom_call.1} parent=1 // pred_check_branch
      %38 = sbr.rel (0) target = $region17
    $region16: #{tpu_custom_call.1} parent=1 // pred_region
      %s40 = ssub.s32 2048, 2048
      %41 = vsyncadd [#allocation6], %s40
      %s42 = sshll.u32 [#allocation7], 4
      %s43 = int_to_ptr.vmem [resolvable:$true] %s42
      %48 = dma.hbm_to_vmem [thread:$0]  %s3, 2048, %s43, [#allocation6], 128, 128, 8
    $region17: #{tpu_custom_call.1} parent=1 // pred_fallthru
      _
    // Predicated region
    $region18: #{tpu_custom_call.1} parent=1 // pred_check
      _
    $region19: #{tpu_custom_call.1} parent=1 // pred_check_branch
      %50 = sbr.rel (0) target = $region21
    $region20: #{tpu_custom_call.1} parent=1 // pred_region
      _
    $region21: #{tpu_custom_call.1} parent=1 // pred_fallthru
      _
    // Predicated region
    $region22: #{tpu_custom_call.1} parent=1 // pred_check
      _
    $region23: #{tpu_custom_call.1} parent=1 // pred_check_branch
      %52 = sbr.rel (0) target = $region25
    $region24: #{tpu_custom_call.1} parent=1 // pred_region
      %53 = dma.done [#allocation3], 64
    $region25: #{tpu_custom_call.1} parent=1 // pred_fallthru
      _
    // Predicated region
    $region26: #{tpu_custom_call.1} parent=1 // pred_check
      _
    $region27: #{tpu_custom_call.1} parent=1 // pred_check_branch
      %55 = sbr.rel (0) target = $region29
    $region28: #{tpu_custom_call.1} parent=1 // pred_region
      %56 = dma.done [#allocation6], 256
    $region29: #{tpu_custom_call.1} parent=1 // pred_fallthru
      _
    // Predicated region
    $region30: #{tpu_custom_call.1} parent=1 // pred_check
      _
    $region31: #{tpu_custom_call.1} parent=1 // pred_check_branch
      %58 = sbr.rel (0) target = $region33
    $region32: #{tpu_custom_call.1} parent=1 // pred_region
      %59 = dma.done [#allocation6], 2048
    $region33: #{tpu_custom_call.1} parent=1 // pred_fallthru
      _
    %v61 = vld [vmem:[#allocation2] sm:$0xf]
    %v62 = vld [vmem:[#allocation5] sm:$0xf]
    %v63 = vld [vmem:[#allocation5 + $0x4] sm:$0xf]
    %v64 = vld [vmem:[#allocation5 + $0x8] sm:$0xf]
    %v65 = vld [vmem:[#allocation5 + $0xc] sm:$0xf]
    %v66 = vld [vmem:[%s2] sm:$0x1]
    %v68 = vlaneseq
    %v69 = vshrl.u32 %v68, 7
    %v70 = vsub.s32 0, %v69
    %v71 = vrot.slane %v66, %v70
    %v77 = vunpack.c.l.b16 %v62
    %v78 = vunpack.c.l.b16 %v63
    %v79 = vunpack.c.l.b16 %v64
    %v80 = vunpack.c.l.b16 %v65
    %v81 = vpack.c.b16 %v78, %v77
    %v82 = vpack.c.b16 %v80, %v79
    %vm85 = vcmask 261120
    %v87 = vsel %vm85, %v61, 0
    %89 = vmatprep.subr.bf16.mxu0 0
    %90 = vmatpush1.bf16.msra.mxu0 %v81
    %91 = vmatprep.subr.bf16.mxu0 0
    %92 = vmatpush1.bf16.msra.mxu0 %v82
    %93 = vmatprep.subr.bf16.mxu0 0
    %94 = vmatpush1.bf16.msra.mxu0 0
    %95 = vmatprep.subr.bf16.mxu0 0
    %96 = vmatpush1.bf16.msra.mxu0 0
    %97 = vmatprep.subr.bf16.mxu0 0
    %98 = vmatpush1.bf16.msra.mxu0 0
    %99 = vmatprep.subr.bf16.mxu0 0
    %100 = vmatpush1.bf16.msra.mxu0 0
    %101 = vmatprep.subr.bf16.mxu0 0
    %102 = vmatpush1.bf16.msra.mxu0 0
    %103 = vmatprep.subr.bf16.mxu0 0
    %104 = vmatpush1.bf16.msra.mxu0 0
    %105 = vmatprep.subr.bf16.mxu0 0
    %106 = vmatpush1.bf16.msra.mxu0 0
    %107 = vmatprep.subr.bf16.mxu0 0
    %108 = vmatpush1.bf16.msra.mxu0 0
    %109 = vmatprep.subr.bf16.mxu0 0
    %110 = vmatpush1.bf16.msra.mxu0 0
    %111 = vmatprep.subr.bf16.mxu0 0
    %112 = vmatpush1.bf16.msra.mxu0 0
    %113 = vmatprep.subr.bf16.mxu0 0
    %114 = vmatpush1.bf16.msra.mxu0 0
    %115 = vmatprep.subr.bf16.mxu0 0
    %116 = vmatpush1.bf16.msra.mxu0 0
    %117 = vmatprep.subr.bf16.mxu0 0
    %118 = vmatpush1.bf16.msra.mxu0 0
    %119 = vmatprep.subr.bf16.mxu0 0
    %120 = vmatpush1.bf16.msra.mxu0 0
    %121 = vmatprep.mubr.bf16.mxu0 0
    %122 = vmatmul.mubr.bf16.gmra.mrb[0].mxu0 %v87
    %v123 = vpop.f32.mrb[0].mxu0
    %v124 = vadd.f32 %v71, %v123
    %v125 = vpop.f32.mrb[0].mxu0
    %v126 = vpop.f32.mrb[0].mxu0
    %v127 = vpop.f32.mrb[0].mxu0
    %128 = vdwg.mxu0
    %v129 = vmax.f32 %v124, 0.0
    %v130 = vpack.c.bf16 %v129, %v129
    %v131 = vld [vmem:[#allocation7] sm:$0xff]
    %v132 = vld [vmem:[#allocation7 + $0x8] sm:$0xff]
    %v133 = vld [vmem:[#allocation7 + $0x10] sm:$0xff]
    %v134 = vld [vmem:[#allocation7 + $0x18] sm:$0xff]
    %v135 = vld [vmem:[#allocation7 + $0x20] sm:$0xff]
    %v136 = vld [vmem:[#allocation7 + $0x28] sm:$0xff]
    %v137 = vld [vmem:[#allocation7 + $0x30] sm:$0xff]
    %v138 = vld [vmem:[#allocation7 + $0x38] sm:$0xff]
    %v139 = vld [vmem:[#allocation7 + $0x40] sm:$0xff]
    %v140 = vld [vmem:[#allocation7 + $0x48] sm:$0xff]
    %v141 = vld [vmem:[#allocation7 + $0x50] sm:$0xff]
    %v142 = vld [vmem:[#allocation7 + $0x58] sm:$0xff]
    %v143 = vld [vmem:[#allocation7 + $0x60] sm:$0xff]
    %v144 = vld [vmem:[#allocation7 + $0x68] sm:$0xff]
    %v145 = vld [vmem:[#allocation7 + $0x70] sm:$0xff]
    %v146 = vld [vmem:[#allocation7 + $0x78] sm:$0xff]
    %v147 = vld [vmem:[%s4] sm:$0x3]
    %v149 = vlaneseq
    %v150 = vshrl.u32 %v149, 7
    %v151 = vsub.s32 0, %v150
    %v152 = vrot.slane %v147, %v151
    %v153 = vlaneseq
    %v154 = vshrl.u32 %v153, 7
    %v155 = vsub.s32 1, %v154
    %v156 = vrot.slane %v147, %v155
    %v175 = vunpack.c.l.b16 %v131
    %v176 = vunpack.c.h.b16 %v131
    %v177 = vunpack.c.l.b16 %v132
    %v178 = vunpack.c.h.b16 %v132
    %v179 = vunpack.c.l.b16 %v133
    %v180 = vunpack.c.h.b16 %v133
    %v181 = vunpack.c.l.b16 %v134
    %v182 = vunpack.c.h.b16 %v134
    %v183 = vunpack.c.l.b16 %v135
    %v184 = vunpack.c.h.b16 %v135
    %v185 = vunpack.c.l.b16 %v136
    %v186 = vunpack.c.h.b16 %v136
    %v187 = vunpack.c.l.b16 %v137
    %v188 = vunpack.c.h.b16 %v137
    %v189 = vunpack.c.l.b16 %v138
    %v190 = vunpack.c.h.b16 %v138
    %v191 = vunpack.c.l.b16 %v139
    %v192 = vunpack.c.h.b16 %v139
    %v193 = vunpack.c.l.b16 %v140
    %v194 = vunpack.c.h.b16 %v140
    %v195 = vunpack.c.l.b16 %v141
    %v196 = vunpack.c.h.b16 %v141
    %v197 = vunpack.c.l.b16 %v142
    %v198 = vunpack.c.h.b16 %v142
    %v199 = vunpack.c.l.b16 %v143
    %v200 = vunpack.c.h.b16 %v143
    %v201 = vunpack.c.l.b16 %v144
    %v202 = vunpack.c.h.b16 %v144
    %v203 = vunpack.c.l.b16 %v145
    %v204 = vunpack.c.h.b16 %v145
    %v205 = vunpack.c.l.b16 %v146
    %v206 = vunpack.c.h.b16 %v146
    %v207 = vpack.c.b16 %v177, %v175
    %v208 = vpack.c.b16 %v178, %v176
    %v209 = vpack.c.b16 %v181, %v179
    %v210 = vpack.c.b16 %v182, %v180
    %v211 = vpack.c.b16 %v185, %v183
    %v212 = vpack.c.b16 %v186, %v184
    %v213 = vpack.c.b16 %v189, %v187
    %v214 = vpack.c.b16 %v190, %v188
    %v215 = vpack.c.b16 %v193, %v191
    %v216 = vpack.c.b16 %v194, %v192
    %v217 = vpack.c.b16 %v197, %v195
    %v218 = vpack.c.b16 %v198, %v196
    %v219 = vpack.c.b16 %v201, %v199
    %v220 = vpack.c.b16 %v202, %v200
    %v221 = vpack.c.b16 %v205, %v203
    %v222 = vpack.c.b16 %v206, %v204
    %239 = vmatprep.subr.bf16.mxu0 %v208
    %240 = vmatpush1.bf16.msra.mxu0 %v207
    %241 = vmatprep.subr.bf16.mxu0 %v210
    %242 = vmatpush1.bf16.msra.mxu0 %v209
    %243 = vmatprep.subr.bf16.mxu0 %v212
    %244 = vmatpush1.bf16.msra.mxu0 %v211
    %245 = vmatprep.subr.bf16.mxu0 %v214
    %246 = vmatpush1.bf16.msra.mxu0 %v213
    %247 = vmatprep.subr.bf16.mxu0 %v216
    %248 = vmatpush1.bf16.msra.mxu0 %v215
    %249 = vmatprep.subr.bf16.mxu0 %v218
    %250 = vmatpush1.bf16.msra.mxu0 %v217
    %251 = vmatprep.subr.bf16.mxu0 %v220
    %252 = vmatpush1.bf16.msra.mxu0 %v219
    %253 = vmatprep.subr.bf16.mxu0 %v222
    %254 = vmatpush1.bf16.msra.mxu0 %v221
    %255 = vmatprep.subr.bf16.mxu0 0
    %256 = vmatpush1.bf16.msra.mxu0 0
    %257 = vmatprep.subr.bf16.mxu0 0
    %258 = vmatpush1.bf16.msra.mxu0 0
    %259 = vmatprep.subr.bf16.mxu0 0
    %260 = vmatpush1.bf16.msra.mxu0 0
    %261 = vmatprep.subr.bf16.mxu0 0
    %262 = vmatpush1.bf16.msra.mxu0 0
    %263 = vmatprep.subr.bf16.mxu0 0
    %264 = vmatpush1.bf16.msra.mxu0 0
    %265 = vmatprep.subr.bf16.mxu0 0
    %266 = vmatpush1.bf16.msra.mxu0 0
    %267 = vmatprep.subr.bf16.mxu0 0
    %268 = vmatpush1.bf16.msra.mxu0 0
    %269 = vmatprep.subr.bf16.mxu0 0
    %270 = vmatpush1.bf16.msra.mxu0 0
    %271 = vmatprep.mubr.bf16.mxu0 0
    %272 = vmatmul.mubr.bf16.gmra.mrb[0].mxu0 %v130
    %v273 = vpop.f32.mrb[0].mxu0
    %v274 = vadd.f32 %v152, %v273
    %v275 = vpop.f32.mrb[0].mxu0
    %v276 = vadd.f32 %v156, %v275
    %v277 = vpop.f32.mrb[0].mxu0
    %v278 = vpop.f32.mrb[0].mxu0
    %279 = vdwg.mxu0
    %v280 = vmax.f32 %v274, 0.0
    %v281 = vmax.f32 %v276, 0.0
    %282 = vst [vmem:[#allocation8] sm:$0xf] %v130
    %v283 = vpack.c.bf16 %v280, %v280
    %v284 = vpack.c.bf16 %v281, %v281
    %v287 = vunpack.c.l.b16 %v283
    %v288 = vunpack.c.l.b16 %v284
    %v289 = vpack.c.b16 %v288, %v287
    %291 = vst [vmem:[#allocation8 + $0x4] sm:$0xff] %v289
    // Predicated region
    $region34: #{tpu_custom_call.1} parent=1 // pred_check
      _
    $region35: #{tpu_custom_call.1} parent=1 // pred_check_branch
      %293 = sbr.rel (0) target = $region37
    $region36: #{tpu_custom_call.1} parent=1 // pred_region
      %s295 = ssub.s32 192, 192
      %296 = vsyncadd [#allocation4], %s295
      %s298 = sshll.u32 [#allocation8], 4
      %s299 = int_to_ptr.vmem [resolvable:$true] %s298
      %301 = dma.vmem_to_hbm [thread:$0]  %s299, 192, %s5, [#allocation4]
    $region37: #{tpu_custom_call.1} parent=1 // pred_fallthru
      _
    // Predicated region
    $region38: #{tpu_custom_call.1} parent=1 // pred_check
      _
    $region39: #{tpu_custom_call.1} parent=1 // pred_check_branch
      %303 = sbr.rel (0) target = $region41
    $region40: #{tpu_custom_call.1} parent=1 // pred_region
      %304 = dma.done [#allocation4], 192
    $region41: #{tpu_custom_call.1} parent=1 // pred_fallthru
      _
    %305 = vsyncpa [#allocation3], 1
    %306 = vsyncpa [#allocation6], 1
    %307 = vsyncpa [#allocation4], 1

</llo_original>
